<compile_context>
chip_gen: v5e
topology: v5e:2x2
jax: 0.10.0
libtpu: 0.0.40
codegen_flags: <defaults>
</compile_context>

<pallas_src>
import functools

import jax
import jax.numpy as jnp
from jax import lax
from jax.experimental import pallas as pl
from jax.experimental.pallas import tpu as pltpu


def _round_up(v, m):
    return ((v + m - 1) // m) * m


def _vmem_limit_bytes():
    # ~3/4 of physical VMEM (v7x 64 MiB -> 48 MiB, v5e/v6e 128 MiB -> 96 MiB),
    # capped at 100 MiB.  Conservative 48 MiB fallback is safe on every chip.
    try:
        cap = int(pltpu.get_tpu_info().vmem_capacity_bytes)
        return int(min(cap * 3 // 4, 100 * 1024 * 1024))
    except Exception:
        return 48 * 1024 * 1024


def _hypergraph_conv_kernel(h_ref, x_ref, w_ref, b_ref, o_ref, *, w_first):
    f32 = jnp.float32
    h = h_ref[0]          # (Np, Ep)  bf16/f32 0/1 incidence (zero padded)
    x = x_ref[0]          # (Np, Cin) f32
    w = w_ref[...]        # (Cin, Cp) f32
    b = b_ref[...]        # (1, Cp)   f32

    # Degree vectors from the resident H tile.  Accumulate in f32 (bf16 sums
    # are inexact once degrees exceed ~256).  Padded rows/cols -> degree 0.
    deg_v = jnp.sum(h, axis=1, keepdims=True, dtype=f32)          # (Np, 1)
    deg_e = jnp.sum(h, axis=0, keepdims=True, dtype=f32)          # (1, Ep)
    dv = jnp.where(deg_v > 0.0, 1.0 / (jnp.sqrt(deg_v) + 1e-6), 0.0)
    de = jnp.where(deg_e > 0.0, 1.0 / (deg_e + 1e-6), 0.0)

    # Optionally apply W first so the H chain carries min(Cin, Cp) channels.
    xc = jnp.dot(x, w, preferred_element_type=f32) if w_first else x  # (Np,C)
    x_s = (dv * xc).astype(h.dtype)                                    # (Np,C)

    # y^T = x_s^T @ H : only the small (Np,C) operand is on the transposed
    # side of the contraction; H stays in its natural (Np,Ep) orientation.
    yT = lax.dot_general(x_s, h, (((0,), (0,)), ((), ())),
                         preferred_element_type=f32)                   # (C,Ep)
    yT_s = (de * yT).astype(h.dtype)                                   # (C,Ep)

    # z = H @ y_s as an NT contraction (q@k^T pattern): contract the lane dim
    # of both operands, again no (Np,Ep) transpose.
    z = lax.dot_general(h, yT_s, (((1,), (1,)), ((), ())),
                        preferred_element_type=f32)                    # (Np,C)
    z_s = dv * z                                                       # (Np,C)

    if w_first:
        out = z_s + b                                                  # (Np,Cp)
    else:
        out = jnp.dot(z_s, w, preferred_element_type=f32) + b          # (Np,Cp)
    o_ref[0] = out.astype(o_ref.dtype)


def hypergraph_conv(x, H, weight, bias, *, matmul_dtype=jnp.bfloat16):
    """HypergraphConv forward.

    x: (B, N, Cin), H: (B, N, E) 0/1 incidence, weight: (Cin, Cout),
    bias: (Cout,).  Returns (B, N, Cout) float32.
    """
    B, N, E = H.shape
    Cin = x.shape[-1]
    Cout = weight.shape[-1]

    Np = _round_up(N, 16)       # bf16 sublane packing
    Ep = _round_up(E, 128)      # lane-dense H / edge intermediates
    Cp = _round_up(Cout, 128)   # lane-dense output stores (unmasked vst)
    # NOTE: for tiny Cout the Cp padding writes extra HBM bytes; lane-dense
    # stores still measured as the better trade at these shapes.

    # Apply W on whichever side keeps the H chain (and its intermediates)
    # narrow: carry min(Cin, Cp) channels through the two big matmuls.
    w_first = Cp < Cin
    chain_c = Cp if w_first else Cin

    md = jnp.dtype(matmul_dtype)
    h_in = jnp.pad(H.astype(matmul_dtype),
                   ((0, 0), (0, Np - N), (0, Ep - E)))
    x_in = jnp.pad(x.astype(jnp.float32), ((0, 0), (0, Np - N), (0, 0)))
    w_p = jnp.pad(weight.astype(jnp.float32), ((0, 0), (0, Cp - Cout)))
    b_p = jnp.pad(bias.astype(jnp.float32).reshape(1, Cout),
                  ((0, 0), (0, Cp - Cout)))

    cost = pl.CostEstimate(
        flops=int(B * (4 * Np * Ep * chain_c + 2 * Np * Cin * Cp)),
        transcendentals=int(B * Np),
        bytes_accessed=int(B * (Np * Ep * md.itemsize + 4 * Np * Cin
                                + 4 * Np * Cp) + 4 * Cin * Cp + 4 * Cp),
    )

    kernel = functools.partial(_hypergraph_conv_kernel, w_first=w_first)

    out = pl.pallas_call(
        kernel,
        out_shape=jax.ShapeDtypeStruct((B, Np, Cp), jnp.float32),
        grid_spec=pltpu.PrefetchScalarGridSpec(
            num_scalar_prefetch=0,
            grid=(B,),
            in_specs=[
                pl.BlockSpec((1, Np, Ep), lambda b: (b, 0, 0)),    # H
                pl.BlockSpec((1, Np, Cin), lambda b: (b, 0, 0)),   # x
                pl.BlockSpec((Cin, Cp), lambda b: (0, 0)),         # W (padded)
                pl.BlockSpec((1, Cp), lambda b: (0, 0)),           # bias
            ],
            out_specs=pl.BlockSpec((1, Np, Cp), lambda b: (b, 0, 0)),
        ),
        compiler_params=pltpu.CompilerParams(
            dimension_semantics=("parallel",),      # batch axis independent
            vmem_limit_bytes=_vmem_limit_bytes(),
        ),
        cost_estimate=cost,
    )(h_in, x_in, w_p, b_p)

    return out[:, :N, :Cout]


def _reference(x, H, weight, bias):
    """Faithful port of the PyTorch forward (SVD-based pinv) for checking."""
    D_v = H.sum(axis=2)
    D_e = H.sum(axis=1)
    D_v_mat = jax.vmap(jnp.diag)(D_v)
    D_e_mat = jax.vmap(jnp.diag)(D_e)
    D_v_inv_sqrt = jnp.linalg.pinv(jnp.sqrt(D_v_mat) + 1e-6)
    D_e_inv = jnp.linalg.pinv(D_e_mat + 1e-6)
    H_T = jnp.swapaxes(H, 1, 2)
    H_norm = D_v_inv_sqrt @ H @ D_e_inv @ H_T @ D_v_inv_sqrt
    return H_norm @ x @ weight + bias


def _make_inputs(key, B, N, E, Cin, Cout):
    kx, kh, kw = jax.random.split(key, 3)
    x = jax.random.normal(kx, (B, N, Cin), dtype=jnp.float32)
    # Random 0/1 incidence; guarantee every node/edge has degree >= 1 so the
    # pinv reference stays well-conditioned.
    H = jax.random.bernoulli(kh, 0.5, (B, N, E)).astype(jnp.float32)
    H = H.at[:, :, 0].set(1.0)
    H = H.at[:, 0, :].set(1.0)
    # kaiming_uniform_-style init for a (in, out) weight (torch fan_in = out).
    fan_in = Cout
    bound = (2.0 ** 0.5) * (3.0 / fan_in) ** 0.5
    weight = jax.random.uniform(kw, (Cin, Cout), minval=-bound, maxval=bound,
                                dtype=jnp.float32)
    bias = jnp.zeros((Cout,), dtype=jnp.float32)
    return x, H, weight, bias


if __name__ == "__main__":
    key = jax.random.PRNGKey(0)
    k1, k2 = jax.random.split(key)

    # --- Test 1: Cin < Cout (W applied after the H chain) -------------------
    B, N, E, Cin, Cout = 2, 16, 8, 8, 16
    x, H, weight, bias = _make_inputs(k1, B, N, E, Cin, Cout)
    ref = _reference(x, H, weight, bias)

    out_f32 = jax.block_until_ready(
        hypergraph_conv(x, H, weight, bias, matmul_dtype=jnp.float32))
    assert out_f32.shape == (B, N, Cout)
    assert bool(jnp.allclose(out_f32, ref, atol=1e-3, rtol=1e-3)), (
        "f32 path mismatch, max abs diff "
        f"{float(jnp.max(jnp.abs(out_f32 - ref)))}")

    out_bf16 = jax.block_until_ready(hypergraph_conv(x, H, weight, bias))
    assert out_bf16.shape == (B, N, Cout)
    assert bool(jnp.allclose(out_bf16, ref, atol=2e-2, rtol=2e-2)), (
        "bf16 path mismatch, max abs diff "
        f"{float(jnp.max(jnp.abs(out_bf16 - ref)))}")

    # --- Test 2: Cin > padded Cout (W applied first; exercises w_first) -----
    B2, N2, E2, Cin2, Cout2 = 2, 16, 8, 160, 4
    x2, H2, weight2, bias2 = _make_inputs(k2, B2, N2, E2, Cin2, Cout2)
    ref2 = _reference(x2, H2, weight2, bias2)

    out2 = jax.block_until_ready(
        hypergraph_conv(x2, H2, weight2, bias2, matmul_dtype=jnp.float32))
    assert out2.shape == (B2, N2, Cout2)
    assert bool(jnp.allclose(out2, ref2, atol=1e-2, rtol=2e-3)), (
        "w_first path mismatch, max abs diff "
        f"{float(jnp.max(jnp.abs(out2 - ref2)))}")

    print("KERNEL_OK")
</pallas_src>

<mosaic_0001>
module attributes {stable_mosaic.version = 11 : i64} {
  func.func @_hypergraph_conv_kernel(%arg0: i32, %arg1: memref<1x16x128xf32, #tpu.memory_space<vmem>>, %arg2: memref<1x16x8xf32, #tpu.memory_space<vmem>>, %arg3: memref<8x128xf32, #tpu.memory_space<vmem>>, %arg4: memref<1x128xf32, #tpu.memory_space<vmem>>, %arg5: memref<1x16x128xf32, #tpu.memory_space<vmem>>) attributes {dimension_semantics = [#tpu.dimension_semantics<parallel>], iteration_bounds = array<i64: 2>, scalar_prefetch = 0 : i64, scratch_operands = 0 : i64, tpu.core_type = #tpu.core_type<tc>, window_params = [{transform_indices = @transform_0, window_bounds = array<i64: 1, 16, 128>}, {transform_indices = @transform_1, window_bounds = array<i64: 1, 16, 8>}, {pipeline_mode = #tpu.pipeline_mode<synchronous>, transform_indices = @transform_2, window_bounds = array<i64: 8, 128>}, {pipeline_mode = #tpu.pipeline_mode<synchronous>, transform_indices = @transform_3, window_bounds = array<i64: 1, 128>}, {transform_indices = @transform_4, window_bounds = array<i64: 1, 16, 128>}]} {
    %c0 = arith.constant 0 : index
    %c0_0 = arith.constant 0 : index
    %c0_1 = arith.constant 0 : index
    %0 = vector.load %arg1[%c0, %c0_0, %c0_1] : memref<1x16x128xf32, #tpu.memory_space<vmem>>, vector<1x16x128xf32>
    %1 = vector.shape_cast %0 : vector<1x16x128xf32> to vector<16x128xf32>
    %c0_2 = arith.constant 0 : index
    %c0_3 = arith.constant 0 : index
    %c0_4 = arith.constant 0 : index
    %2 = vector.load %arg2[%c0_2, %c0_3, %c0_4] : memref<1x16x8xf32, #tpu.memory_space<vmem>>, vector<1x16x8xf32>
    %3 = vector.shape_cast %2 : vector<1x16x8xf32> to vector<16x8xf32>
    %c0_5 = arith.constant 0 : index
    %c0_6 = arith.constant 0 : index
    %4 = vector.load %arg3[%c0_5, %c0_6] : memref<8x128xf32, #tpu.memory_space<vmem>>, vector<8x128xf32>
    %c0_7 = arith.constant 0 : index
    %c0_8 = arith.constant 0 : index
    %5 = vector.load %arg4[%c0_7, %c0_8] : memref<1x128xf32, #tpu.memory_space<vmem>>, vector<1x128xf32>
    %cst = arith.constant dense<0.000000e+00> : vector<16xf32>
    %6 = vector.multi_reduction <add>, %1, %cst [1] : vector<16x128xf32> to vector<16xf32>
    %7 = vector.shape_cast %6 : vector<16xf32> to vector<16x1xf32>
    %cst_9 = arith.constant dense<0.000000e+00> : vector<128xf32>
    %8 = vector.multi_reduction <add>, %1, %cst_9 [0] : vector<16x128xf32> to vector<128xf32>
    %9 = vector.shape_cast %8 : vector<128xf32> to vector<1x128xf32>
    %cst_10 = arith.constant 0.000000e+00 : f32
    %10 = vector.broadcast %cst_10 : f32 to vector<16x1xf32>
    %11 = arith.cmpf ogt, %7, %10 : vector<16x1xf32>
    %12 = math.sqrt %7 : vector<16x1xf32>
    %cst_11 = arith.constant 9.99999997E-7 : f32
    %13 = vector.broadcast %cst_11 : f32 to vector<16x1xf32>
    %14 = arith.addf %12, %13 : vector<16x1xf32>
    %cst_12 = arith.constant 1.000000e+00 : f32
    %15 = vector.broadcast %cst_12 : f32 to vector<16x1xf32>
    %16 = arith.divf %15, %14 : vector<16x1xf32>
    %cst_13 = arith.constant 0.000000e+00 : f32
    %17 = vector.broadcast %cst_13 : f32 to vector<16x1xf32>
    %18 = arith.select %11, %16, %17 : vector<16x1xi1>, vector<16x1xf32>
    %cst_14 = arith.constant 0.000000e+00 : f32
    %19 = vector.broadcast %cst_14 : f32 to vector<1x128xf32>
    %20 = arith.cmpf ogt, %9, %19 : vector<1x128xf32>
    %cst_15 = arith.constant 9.99999997E-7 : f32
    %21 = vector.broadcast %cst_15 : f32 to vector<1x128xf32>
    %22 = arith.addf %9, %21 : vector<1x128xf32>
    %cst_16 = arith.constant 1.000000e+00 : f32
    %23 = vector.broadcast %cst_16 : f32 to vector<1x128xf32>
    %24 = arith.divf %23, %22 : vector<1x128xf32>
    %cst_17 = arith.constant 0.000000e+00 : f32
    %25 = vector.broadcast %cst_17 : f32 to vector<1x128xf32>
    %26 = arith.select %20, %24, %25 : vector<1x128xi1>, vector<1x128xf32>
    %27 = vector.broadcast %18 : vector<16x1xf32> to vector<16x8xf32>
    %28 = arith.mulf %27, %3 : vector<16x8xf32>
    %cst_18 = arith.constant dense<0.000000e+00> : vector<8x128xf32>
    %29 = tpu.matmul %28, %1, %cst_18 {dimension_numbers = #tpu.dot_dimension_numbers<[0], [0], [1], [1], [0, 1, 1, 1], [], []>} : vector<16x8xf32>, vector<16x128xf32>, vector<8x128xf32> -> vector<8x128xf32>
    %30 = vector.broadcast %26 : vector<1x128xf32> to vector<8x128xf32>
    %31 = arith.mulf %30, %29 : vector<8x128xf32>
    %cst_19 = arith.constant dense<0.000000e+00> : vector<16x8xf32>
    %32 = tpu.matmul %1, %31, %cst_19 {dimension_numbers = #tpu.dot_dimension_numbers<[1], [1], [0], [0], [0, 0, 1, 0], [], []>} : vector<16x128xf32>, vector<8x128xf32>, vector<16x8xf32> -> vector<16x8xf32>
    %33 = vector.broadcast %18 : vector<16x1xf32> to vector<16x8xf32>
    %34 = arith.mulf %33, %32 : vector<16x8xf32>
    %cst_20 = arith.constant dense<0.000000e+00> : vector<16x128xf32>
    %35 = tpu.matmul %34, %4, %cst_20 {dimension_numbers = #tpu.dot_dimension_numbers<[1], [0], [0], [1], [0, 0, 1, 1], [], []>} : vector<16x8xf32>, vector<8x128xf32>, vector<16x128xf32> -> vector<16x128xf32>
    %36 = vector.broadcast %5 : vector<1x128xf32> to vector<16x128xf32>
    %37 = arith.addf %35, %36 : vector<16x128xf32>
    %c0_21 = arith.constant 0 : index
    %c0_22 = arith.constant 0 : index
    %c0_23 = arith.constant 0 : index
    %38 = vector.load %arg5[%c0_21, %c0_22, %c0_23] : memref<1x16x128xf32, #tpu.memory_space<vmem>>, vector<1x16x128xf32>
    %39 = vector.shape_cast %38 : vector<1x16x128xf32> to vector<16x128xf32>
    %40 = vector.shape_cast %37 : vector<16x128xf32> to vector<1x16x128xf32>
    tpu.vector_store %arg5[%c0_21, %c0_22, %c0_23], %40 {strides = array<i32>} : memref<1x16x128xf32, #tpu.memory_space<vmem>>, vector<1x16x128xf32>,
    return
  }
  func.func @transform_0(%arg0: i32) -> (i32, i32, i32) {
    %c0_i32 = arith.constant 0 : i32
    %c0_i32_0 = arith.constant 0 : i32
    %c0_i32_1 = arith.constant 0 : i32
    return %arg0, %c0_i32, %c0_i32_0 : i32, i32, i32
  }
  func.func @transform_1(%arg0: i32) -> (i32, i32, i32) {
    %c0_i32 = arith.constant 0 : i32
    %c0_i32_0 = arith.constant 0 : i32
    %c0_i32_1 = arith.constant 0 : i32
    return %arg0, %c0_i32, %c0_i32_0 : i32, i32, i32
  }
  func.func @transform_2(%arg0: i32) -> (i32, i32) {
    %c0_i32 = arith.constant 0 : i32
    %c0_i32_0 = arith.constant 0 : i32
    %c0_i32_1 = arith.constant 0 : i32
    return %c0_i32, %c0_i32_0 : i32, i32
  }
  func.func @transform_3(%arg0: i32) -> (i32, i32) {
    %c0_i32 = arith.constant 0 : i32
    %c0_i32_0 = arith.constant 0 : i32
    %c0_i32_1 = arith.constant 0 : i32
    return %c0_i32, %c0_i32_0 : i32, i32
  }
  func.func @transform_4(%arg0: i32) -> (i32, i32, i32) {
    %c0_i32 = arith.constant 0 : i32
    %c0_i32_0 = arith.constant 0 : i32
    %c0_i32_1 = arith.constant 0 : i32
    return %arg0, %c0_i32, %c0_i32_0 : i32, i32, i32
  }
}

</mosaic_0001>

<llo_original>
// kernel: tpu_custom_call.1
$region0: #{tpu_custom_call.1}
  #allocation0 [shape = 'u32[]', space=smem, size = 0x4, offset = 0x4, fixed_abs, tag = 'smem constant byte address 0x4 - core index']
  #allocation1 [shape = 'u32[72,128]{1,0:T(1,128)}', space=vmem, size = 0x9000, scoped, tag = 'internal scratch']
  %s0 = inlined_call_operand.vmem [shape: f32[2,16,128], index: 0, kind: input, shape index: {}]
  %s1 = inlined_call_operand.vmem [shape: f32[2,16,8], index: 1, kind: input, shape index: {}]
  %s2 = inlined_call_operand.vmem [shape: f32[8,128], index: 2, kind: input, shape index: {}]
  %s3 = inlined_call_operand.vmem [shape: f32[1,128], index: 3, kind: input, shape index: {}]
  %s4 = inlined_call_operand.hbm [shape: f32[2,16,128], index: 4, kind: output, shape index: {}]
  %s5 = sld [smem:[#allocation0]]
  $region49: #{tpu_custom_call.1} parent=0
    _
  %s7 = ssub.s32 1, %s5
  %s8 = scalar_select 0, %s7, %s5
  $region1: #{tpu_custom_call.1} parent=0
    #allocation2 [shape = 'u8[16384]{0}', space=vmem, size = 0x4000, scoped, tag = 'output window, operand 0']
    #allocation3 [shape = 's32[2]{0}', space=sflag, size = 0x8, scoped, tag = 'scoped memory for tpu_custom_call.1']
    %9 = vsyncpa [#allocation3], 0
    %s10 = scalar_lea.sflag [#allocation3], 1
    %11 = vsyncpa %s10, 0
    loop: start=0, step=1, limit=4
    $region2: #{tpu_custom_call.1} parent=1 // loop_pre_header
      _
    $region3: #{tpu_custom_call.1} parent=1 // loop_header
      %s13 = sphi 0, %s17
      %p14 = scmp.ge.s32.totalorder %s13, 4
      %s23 = sphi 0, %s25
      %s26 = sphi 0, %s23
      %s27 = sphi 0, %s26
      %s43 = sphi 0, %s27
      %s49 = sphi 0, %s51
      %s52 = sphi 0, %s49
      %s53 = sphi 0, %s52
      %s69 = sphi 0, %s53
      %s73 = sphi 0, %s73
      %s75 = sphi 0, %s73
      %s76 = sphi 0, %s75
      %s90 = sphi 0, %s76
      %s94 = sphi 0, %s94
      %s96 = sphi 0, %s94
      %s97 = sphi 0, %s96
      %s111 = sphi 0, %s97
      %s117 = sphi 0, %s119
      %s120 = sphi 0, %s117
      %s121 = sphi 0, %s120
      %s137 = sphi 0, %s121
    $region4: #{tpu_custom_call.1} parent=1 // loop_header_branch
      %16 = sbr.rel (%p14) target = $region8
    $region5: #{tpu_custom_call.1} parent=1 // loop_body
      %s18 = ssub.s32 %s13, 1
      %s19 = ssub.s32 %s13, 2
      %s20 = sadd.s32 %s13, 1
      %s21 = ssub.s32 %s13, %s20
      %p22 = scmp.eq.s32.totalorder %s21, 0
      %s24 = sadd.s32 %s23, 1
      %s25 = scalar_select %p22, %s23, %s24
      %p28 = pneg %p22
      %p29 = scmp.eq.s32.totalorder %s13, 1
      %p30 = por %p28, %p29
      %p31 = scmp.ne.s32.totalorder %s23, %s26
      %p32 = scmp.eq.s32.totalorder %s13, 0
      %p33 = por %p31, %p32
      %p34 = scmp.ne.s32.totalorder %s23, %s26
      %p35 = scmp.eq.s32.totalorder %s18, 1
      %p36 = por %p34, %p35
      %p37 = scmp.ne.s32.totalorder %s26, %s27
      %p38 = scmp.eq.s32.totalorder %s18, 0
      %p39 = por %p37, %p38
      %p40 = scmp.ne.s32.totalorder %s26, %s27
      %p41 = scmp.eq.s32.totalorder %s19, 1
      %p42 = por %p40, %p41
      %p44 = scmp.ne.s32.totalorder %s27, %s43
      %p45 = scmp.eq.s32.totalorder %s19, 0
      %p46 = por %p44, %p45
      %s47 = ssub.s32 %s13, %s20
      %p48 = scmp.eq.s32.totalorder %s47, 0
      %s50 = sadd.s32 %s49, 1
      %s51 = scalar_select %p48, %s49, %s50
      %p54 = pneg %p48
      %p55 = scmp.eq.s32.totalorder %s13, 1
      %p56 = por %p54, %p55
      %p57 = scmp.ne.s32.totalorder %s49, %s52
      %p58 = scmp.eq.s32.totalorder %s13, 0
      %p59 = por %p57, %p58
      %p60 = scmp.ne.s32.totalorder %s49, %s52
      %p61 = scmp.eq.s32.totalorder %s18, 1
      %p62 = por %p60, %p61
      %p63 = scmp.ne.s32.totalorder %s52, %s53
      %p64 = scmp.eq.s32.totalorder %s18, 0
      %p65 = por %p63, %p64
      %p66 = scmp.ne.s32.totalorder %s52, %s53
      %p67 = scmp.eq.s32.totalorder %s19, 1
      %p68 = por %p66, %p67
      %p70 = scmp.ne.s32.totalorder %s53, %s69
      %p71 = scmp.eq.s32.totalorder %s19, 0
      %p72 = por %p70, %p71
      %s74 = sadd.s32 %s73, 1
      %p77 = scmp.eq.s32.totalorder %s13, 1
      %p78 = scmp.ne.s32.totalorder %s73, %s75
      %p79 = scmp.eq.s32.totalorder %s13, 0
      %p80 = por %p78, %p79
      %p81 = scmp.ne.s32.totalorder %s73, %s75
      %p82 = scmp.eq.s32.totalorder %s18, 1
      %p83 = por %p81, %p82
      %p84 = scmp.ne.s32.totalorder %s75, %s76
      %p85 = scmp.eq.s32.totalorder %s18, 0
      %p86 = por %p84, %p85
      %p87 = scmp.ne.s32.totalorder %s75, %s76
      %p88 = scmp.eq.s32.totalorder %s19, 1
      %p89 = por %p87, %p88
      %p91 = scmp.ne.s32.totalorder %s76, %s90
      %p92 = scmp.eq.s32.totalorder %s19, 0
      %p93 = por %p91, %p92
      %s95 = sadd.s32 %s94, 1
      %p98 = scmp.eq.s32.totalorder %s13, 1
      %p99 = scmp.ne.s32.totalorder %s94, %s96
      %p100 = scmp.eq.s32.totalorder %s13, 0
      %p101 = por %p99, %p100
      %p102 = scmp.ne.s32.totalorder %s94, %s96
      %p103 = scmp.eq.s32.totalorder %s18, 1
      %p104 = por %p102, %p103
      %p105 = scmp.ne.s32.totalorder %s96, %s97
      %p106 = scmp.eq.s32.totalorder %s18, 0
      %p107 = por %p105, %p106
      %p108 = scmp.ne.s32.totalorder %s96, %s97
      %p109 = scmp.eq.s32.totalorder %s19, 1
      %p110 = por %p108, %p109
      %p112 = scmp.ne.s32.totalorder %s97, %s111
      %p113 = scmp.eq.s32.totalorder %s19, 0
      %p114 = por %p112, %p113
      %s115 = ssub.s32 %s13, %s20
      %p116 = scmp.eq.s32.totalorder %s115, 0
      %s118 = sadd.s32 %s117, 1
      %s119 = scalar_select %p116, %s117, %s118
      %p122 = pneg %p116
      %p123 = scmp.eq.s32.totalorder %s13, 1
      %p124 = por %p122, %p123
      %p125 = scmp.ne.s32.totalorder %s117, %s120
      %p126 = scmp.eq.s32.totalorder %s13, 0
      %p127 = por %p125, %p126
      %p128 = scmp.ne.s32.totalorder %s117, %s120
      %p129 = scmp.eq.s32.totalorder %s18, 1
      %p130 = por %p128, %p129
      %p131 = scmp.ne.s32.totalorder %s120, %s121
      %p132 = scmp.eq.s32.totalorder %s18, 0
      %p133 = por %p131, %p132
      %p134 = scmp.ne.s32.totalorder %s120, %s121
      %p135 = scmp.eq.s32.totalorder %s19, 1
      %p136 = por %p134, %p135
      %p138 = scmp.ne.s32.totalorder %s121, %s137
      %p139 = scmp.eq.s32.totalorder %s19, 0
      %p140 = por %p138, %p139
      %p141 = scmp.le.s32.totalorder 1, %s13
      %p142 = scmp.lt.s32.totalorder %s13, 3
      %p143 = pnand %p141, %p142
      %p144 = pneg %p143
      // Predicated region
      $region9: #{tpu_custom_call.1} parent=5 // pred_check
        _
      $region10: #{tpu_custom_call.1} parent=5 // pred_check_branch
        %146 = sbr.rel (%p143) target = $region12
      $region11: #{tpu_custom_call.1} parent=5 // pred_region
        %s147 = ssub.s32 %s13, 1
        // Predicated region
        $region13: #{tpu_custom_call.1} parent=11 // pred_check
          %p148 = pneg %p86
        $region14: #{tpu_custom_call.1} parent=11 // pred_check_branch
          %150 = sbr.rel (%p148) target = $region16
        $region15: #{tpu_custom_call.1} parent=11 // pred_region
          _
        $region16: #{tpu_custom_call.1} parent=11 // pred_fallthru
          _
        // Predicated region
        $region17: #{tpu_custom_call.1} parent=11 // pred_check
          %p151 = pneg %p107
        $region18: #{tpu_custom_call.1} parent=11 // pred_check_branch
          %153 = sbr.rel (%p151) target = $region20
        $region19: #{tpu_custom_call.1} parent=11 // pred_region
          _
        $region20: #{tpu_custom_call.1} parent=11 // pred_fallthru
          _
      $region12: #{tpu_custom_call.1} parent=5 // pred_fallthru
        _
      %p154 = scmp.lt.s32.totalorder %s13, 2
      // Predicated region
      $region21: #{tpu_custom_call.1} parent=5 // pred_check
        %p155 = pneg %p154
      $region22: #{tpu_custom_call.1} parent=5 // pred_check_branch
        %157 = sbr.rel (%p155) target = $region24
      $region23: #{tpu_custom_call.1} parent=5 // pred_region
        // Predicated region
        $region25: #{tpu_custom_call.1} parent=23 // pred_check
          %p158 = pneg %p33
        $region26: #{tpu_custom_call.1} parent=23 // pred_check_branch
          %160 = sbr.rel (%p158) target = $region28
        $region27: #{tpu_custom_call.1} parent=23 // pred_region
          %p161 = scmp.lt.s32.totalorder %s13, 1
          %s162 = scalar_select %p161, %s13, 1
          %s163 = smul.addr %s162, 2
          %s164 = smul.addr %s163, 8
          %s165 = scalar_lea.vmem %s0, %s164
        $region28: #{tpu_custom_call.1} parent=23 // pred_fallthru
          _
        // Predicated region
        $region29: #{tpu_custom_call.1} parent=23 // pred_check
          %p166 = pneg %p59
        $region30: #{tpu_custom_call.1} parent=23 // pred_check_branch
          %168 = sbr.rel (%p166) target = $region32
        $region31: #{tpu_custom_call.1} parent=23 // pred_region
          %p169 = scmp.lt.s32.totalorder %s13, 1
          %s170 = scalar_select %p169, %s13, 1
          %s171 = smul.addr %s170, 2
          %s172 = smul.addr %s171, 8
          %s173 = scalar_lea.vmem %s1, %s172
        $region32: #{tpu_custom_call.1} parent=23 // pred_fallthru
          _
      $region24: #{tpu_custom_call.1} parent=5 // pred_fallthru
        _
      %p174 = scmp.le.s32.totalorder 1, %s13
      %p175 = scmp.lt.s32.totalorder %s13, 3
      %p176 = pnand %p174, %p175
      %p177 = pneg %p176
      // Predicated region
      $region33: #{tpu_custom_call.1} parent=5 // pred_check
        _
      $region34: #{tpu_custom_call.1} parent=5 // pred_check_branch
        %179 = sbr.rel (%p176) target = $region36
      $region35: #{tpu_custom_call.1} parent=5 // pred_region
        %s180 = ssub.s32 %s13, 1
        %p181 = scmp.lt.s32.totalorder %s18, 1
        %s182 = scalar_select %p181, %s18, 1
        %s183 = smul.addr %s182, 2
        %s184 = smul.addr %s183, 8
        %s185 = scalar_lea.vmem %s0, %s184
        %p186 = pneg %p39
        %p187 = pneg %p36
        %p188 = scmp.lt.s32.totalorder %s18, 1
        %s189 = scalar_select %p188, %s18, 1
        %s190 = smul.addr %s189, 2
        %s191 = smul.addr %s190, 8
        %s192 = scalar_lea.vmem %s1, %s191
        %p193 = pneg %p65
        %p194 = pneg %p62
        %p195 = pneg %p86
        %p196 = pneg %p83
        %p197 = pneg %p107
        %p198 = pneg %p104
        %p199 = pneg %p133
        %p200 = pneg %p130
        %s201 = sand.u32 %s120, 1
        %s202 = scalar_lea.sflag [#allocation3], %s201
        %s203 = sand.u32 %s120, 1
        %s204 = smul.addr %s203, 16
        %s205 = scalar_lea.vmem [#allocation2], %s204
        %p206 = scmp.lt.s32.totalorder %s18, 1
        %s207 = scalar_select %p206, %s18, 1
        %s208 = smul.addr %s207, 2
        %s209 = smul.addr %s208, 8
        %s210 = scalar_lea.vmem %s0, %s209
        %p211 = scmp.lt.s32.totalorder %s18, 1
        %s212 = scalar_select %p211, %s18, 1
        %s213 = smul.addr %s212, 2
        %s214 = smul.addr %s213, 8
        %s215 = scalar_lea.vmem %s1, %s214
        %v216 = vld [vmem:[%s210] sm:$0xff]
        %v217 = vld [vmem:[%s210 + $0x8] sm:$0xff]
        %v218 = vld [vmem:[%s215] sm:$0xff]
        %v219 = vld [vmem:[%s215 + $0x8] sm:$0xff]
        %v220 = vld [vmem:[%s2] sm:$0xff]
        %v221 = vld [vmem:[%s3] sm:$0x1]
        %222 = vadd.xlane.f32.xlu0 %v216
        %v223 = vpop.xlane.xlu0 %222
        %224 = vadd.xlane.f32.xlu0 %v217
        %v225 = vpop.xlane.xlu0 %224
        %v226 = vadd.f32 %v216, %v217
        %v227 = vrot.slane %v226, 4
        %v228 = vadd.f32 %v226, %v227
        %v229 = vrot.slane %v228, 2
        %v230 = vadd.f32 %v228, %v229
        %v231 = vrot.slane %v230, 1
        %v232 = vadd.f32 %v230, %v231
        %vm233 = vcmp.gt.f32.partialorder %v223, 0.0
        %vm234 = vcmp.gt.f32.partialorder %v225, 0.0
        %v235 = vrsqrt.pop %v223
        %v236 = vmul.f32 %v235, %v223
        %v237 = vmul.f32 %v236, %v235
        %v238 = vmul.f32 0.5, %v237
        %v239 = vsub.f32 1.5, %v238
        %v240 = vmul.f32 %v235, %v239
        %v241 = vmul.f32 %v223, %v240
        %vm242 = vcmp.eq.f32.partialorder %v223, inf
        %v243 = vsel %vm242, %v223, %v241
        %vm244 = vcmp.eq.f32.partialorder %v223, 0.0
        %v245 = vand.u32 %v223, 2147483648
        %v246 = vsel %vm244, %v245, %v243
        %v247 = vrsqrt.pop %v225
        %v248 = vmul.f32 %v247, %v225
        %v249 = vmul.f32 %v248, %v247
        %v250 = vmul.f32 0.5, %v249
        %v251 = vsub.f32 1.5, %v250
        %v252 = vmul.f32 %v247, %v251
        %v253 = vmul.f32 %v225, %v252
        %vm254 = vcmp.eq.f32.partialorder %v225, inf
        %v255 = vsel %vm254, %v225, %v253
        %vm256 = vcmp.eq.f32.partialorder %v225, 0.0
        %v257 = vand.u32 %v225, 2147483648
        %v258 = vsel %vm256, %v257, %v255
        %v259 = vadd.f32 %v246, 1e-06
        %v260 = vadd.f32 %v258, 1e-06
        %v261 = vrcp.pop %v259
        %v262 = vmul.f32 %v259, %v261
        %v263 = vsub.f32 1.0, %v262
        %v264 = vmul.f32 %v261, %v263
        %v265 = vadd.f32 %v261, %v264
        %vm266 = vweird.f32 %v259
        %vm267 = vweird.f32 %v261
        %vm268 = vmor %vm266, %vm267
        %v269 = vsel %vm268, %v261, %v265
        %v270 = vand.u32 2147483647, %v259
        %vm271 = vcmp.eq.f32.partialorder %v270, 8.507059e+37
        %v272 = vand.u32 %v259, 2147483648
        %v273 = vor.u32 1.1754944e-38, %v272
        %v274 = vsel %vm271, %v273, %v269
        %v275 = vmul.f32 1.0, %v274
        %v276 = vrcp.pop %v260
        %v277 = vmul.f32 %v260, %v276
        %v278 = vsub.f32 1.0, %v277
        %v279 = vmul.f32 %v276, %v278
        %v280 = vadd.f32 %v276, %v279
        %vm281 = vweird.f32 %v260
        %vm282 = vweird.f32 %v276
        %vm283 = vmor %vm281, %vm282
        %v284 = vsel %vm283, %v276, %v280
        %v285 = vand.u32 2147483647, %v260
        %vm286 = vcmp.eq.f32.partialorder %v285, 8.507059e+37
        %v287 = vand.u32 %v260, 2147483648
        %v288 = vor.u32 1.1754944e-38, %v287
        %v289 = vsel %vm286, %v288, %v284
        %v290 = vmul.f32 1.0, %v289
        %v291 = vsel %vm233, %v275, 0.0
        %v292 = vsel %vm234, %v290, 0.0
        %vm293 = vcmp.gt.f32.partialorder %v232, 0.0
        %v294 = vadd.f32 %v232, 1e-06
        %v295 = vrcp.pop %v294
        %v296 = vmul.f32 %v294, %v295
        %v297 = vsub.f32 1.0, %v296
        %v298 = vmul.f32 %v295, %v297
        %v299 = vadd.f32 %v295, %v298
        %vm300 = vweird.f32 %v294
        %vm301 = vweird.f32 %v295
        %vm302 = vmor %vm300, %vm301
        %v303 = vsel %vm302, %v295, %v299
        %v304 = vand.u32 2147483647, %v294
        %vm305 = vcmp.eq.f32.partialorder %v304, 8.507059e+37
        %v306 = vand.u32 %v294, 2147483648
        %v307 = vor.u32 1.1754944e-38, %v306
        %v308 = vsel %vm305, %v307, %v303
        %v309 = vmul.f32 1.0, %v308
        %v310 = vsel %vm293, %v309, 0.0
        %v311 = vmul.f32 %v291, %v218
        %v312 = vmul.f32 %v292, %v219
        %313 = vxpose.xlu0.b32.start [1/16] %v311, 128
        %314 = vxpose.xlu0.b32.cont [2/16] %v312, 128
        %315 = vxpose.xlu0.b32.cont [3/16] 0.0, 128
        %316 = vxpose.xlu0.b32.cont [4/16] 0.0, 128
        %317 = vxpose.xlu0.b32.cont [5/16] 0.0, 128
        %318 = vxpose.xlu0.b32.cont [6/16] 0.0, 128
        %319 = vxpose.xlu0.b32.cont [7/16] 0.0, 128
        %320 = vxpose.xlu0.b32.cont [8/16] 0.0, 128
        %321 = vxpose.xlu0.b32.cont [9/16] 0.0, 128
        %322 = vxpose.xlu0.b32.cont [10/16] 0.0, 128
        %323 = vxpose.xlu0.b32.cont [11/16] 0.0, 128
        %324 = vxpose.xlu0.b32.cont [12/16] 0.0, 128
        %325 = vxpose.xlu0.b32.cont [13/16] 0.0, 128
        %326 = vxpose.xlu0.b32.cont [14/16] 0.0, 128
        %327 = vxpose.xlu0.b32.cont [15/16] 0.0, 128
        %328 = vxpose.xlu0.b32.end [16/16] 0.0, 128
        %v329 = vpop.trf.xlu0
        %v330 = vpop.trf.xlu0
        %v331 = vpop.trf.xlu0
        %v332 = vpop.trf.xlu0
        %v333 = vpop.trf.xlu0
        %v334 = vpop.trf.xlu0
        %v335 = vpop.trf.xlu0
        %v336 = vpop.trf.xlu0
        %v337 = vpop.trf.xlu0
        %v338 = vpop.trf.xlu0
        %v339 = vpop.trf.xlu0
        %v340 = vpop.trf.xlu0
        %v341 = vpop.trf.xlu0
        %v342 = vpop.trf.xlu0
        %v343 = vpop.trf.xlu0
        %v344 = vpop.trf.xlu0
        %vm345 = vcmask 130048
        %v347 = vsel %vm345, %v329, 0
        %349 = vmatpush.msra.mxu0 0.0
        %350 = vmatpush.msra.mxu0 0.0
        %351 = vmatpush.msra.mxu0 0.0
        %352 = vmatpush.msra.mxu0 0.0
        %353 = vmatpush.msra.mxu0 0.0
        %354 = vmatpush.msra.mxu0 0.0
        %355 = vmatpush.msra.mxu0 0.0
        %356 = vmatpush.msra.mxu0 0.0
        %357 = vmatpush.msra.mxu0 0.0
        %358 = vmatpush.msra.mxu0 0.0
        %359 = vmatpush.msra.mxu0 0.0
        %360 = vmatpush.msra.mxu0 0.0
        %361 = vmatpush.msra.mxu0 0.0
        %362 = vmatpush.msra.mxu0 0.0
        %363 = vmatpush.msra.mxu0 %v217
        %364 = vmatpush.msra.mxu0 %v216
        %365 = vmatmul.f32.gmra.mxu0 %v347
        %v366 = vpop.f32.mrf.mxu0
        %v367 = vadd.f32 0.0, %v366
        %368 = vdwg.mxu0
        %v369 = vmul.f32 %v310, %v367
        %370 = vmatpush.xpose.msra.mxu0 0.0
        %371 = vmatpush.xpose.msra.mxu0 0.0
        %372 = vmatpush.xpose.msra.mxu0 0.0
        %373 = vmatpush.xpose.msra.mxu0 0.0
        %374 = vmatpush.xpose.msra.mxu0 0.0
        %375 = vmatpush.xpose.msra.mxu0 0.0
        %376 = vmatpush.xpose.msra.mxu0 0.0
        %377 = vmatpush.xpose.msra.mxu0 0.0
        %378 = vmatpush.xpose.msra.mxu0 0.0
        %379 = vmatpush.xpose.msra.mxu0 0.0
        %380 = vmatpush.xpose.msra.mxu0 0.0
        %381 = vmatpush.xpose.msra.mxu0 0.0
        %382 = vmatpush.xpose.msra.mxu0 0.0
        %383 = vmatpush.xpose.msra.mxu0 0.0
        %384 = vmatpush.xpose.msra.mxu0 0.0
        %385 = vmatpush.xpose.msra.mxu0 %v369
        %386 = vmatmul.f32.gmra.mxu0 %v216
        %v387 = vpop.f32.mrf.mxu0
        %v388 = vadd.f32 0.0, %v387
        %389 = vmatmul.f32.gmra.mxu0 %v217
        %v390 = vpop.f32.mrf.mxu0
        %v391 = vadd.f32 0.0, %v390
        %392 = vdwg.mxu0
        %v393 = vmul.f32 %v291, %v388
        %v394 = vmul.f32 %v292, %v391
        %v396 = vperm.slane %v221, 0
        %vm398 = vcmask 64512
        %v400 = vsel %vm398, %v393, 0
        %v403 = vsel %vm398, %v394, 0
        %405 = vmatpush.msra.mxu0 0.0
        %406 = vmatpush.msra.mxu0 0.0
        %407 = vmatpush.msra.mxu0 0.0
        %408 = vmatpush.msra.mxu0 0.0
        %409 = vmatpush.msra.mxu0 0.0
        %410 = vmatpush.msra.mxu0 0.0
        %411 = vmatpush.msra.mxu0 0.0
        %412 = vmatpush.msra.mxu0 0.0
        %413 = vmatpush.msra.mxu0 0.0
        %414 = vmatpush.msra.mxu0 0.0
        %415 = vmatpush.msra.mxu0 0.0
        %416 = vmatpush.msra.mxu0 0.0
        %417 = vmatpush.msra.mxu0 0.0
        %418 = vmatpush.msra.mxu0 0.0
        %419 = vmatpush.msra.mxu0 0.0
        %420 = vmatpush.msra.mxu0 %v220
        %421 = vmatmul.f32.gmra.mxu0 %v400
        %v422 = vpop.f32.mrf.mxu0
        %v423 = vadd.f32 %v396, %v422
        %424 = vmatmul.f32.gmra.mxu0 %v403
        %v425 = vpop.f32.mrf.mxu0
        %v426 = vadd.f32 %v396, %v425
        %427 = vdwg.mxu0
        %428 = vst [vmem:[%s205] sm:$0xff] %v423
        %429 = vst [vmem:[%s205 + $0x8] sm:$0xff] %v426
        %s430 = sand.u32 %s120, 1
        %s431 = scalar_lea.sflag [#allocation3], %s430
        %s432 = sand.u32 %s120, 1
        %s433 = smul.addr %s432, 16
        %s434 = scalar_lea.vmem [#allocation2], %s433
        // Predicated region
        $region37: #{tpu_custom_call.1} parent=35 // pred_check
          %p435 = pneg %p130
        $region38: #{tpu_custom_call.1} parent=35 // pred_check_branch
          %437 = sbr.rel (%p435) target = $region40
        $region39: #{tpu_custom_call.1} parent=35 // pred_region
          %439 = vsyncadd %s431, 0
          %s440 = smul.addr %s18, 2
          %s441 = smul.addr %s440, 8
          %s442 = scalar_lea.hbm %s4, %s441
          %s443 = sshll.u32 %s434, 4
          %s444 = int_to_ptr.vmem [resolvable:$true] %s443
          %s445 = sshll.u32 %s442, 4
          %s446 = int_to_ptr.hbm [resolvable:$true] %s445
          %451 = dma.vmem_to_hbm [thread:$0]  %s444, 256, %s446, %s431, 128, 128, 8
        $region40: #{tpu_custom_call.1} parent=35 // pred_fallthru
          _
      $region36: #{tpu_custom_call.1} parent=5 // pred_fallthru
        _
      %p452 = scmp.le.s32.totalorder 2, %s13
      // Predicated region
      $region41: #{tpu_custom_call.1} parent=5 // pred_check
        %p453 = pneg %p452
      $region42: #{tpu_custom_call.1} parent=5 // pred_check_branch
        %455 = sbr.rel (%p453) target = $region44
      $region43: #{tpu_custom_call.1} parent=5 // pred_region
        %s456 = ssub.s32 %s13, 2
        // Predicated region
        $region45: #{tpu_custom_call.1} parent=43 // pred_check
          %p457 = pneg %p136
        $region46: #{tpu_custom_call.1} parent=43 // pred_check_branch
          %459 = sbr.rel (%p457) target = $region48
        $region47: #{tpu_custom_call.1} parent=43 // pred_region
          %s460 = sand.u32 %s121, 1
          %s461 = scalar_lea.sflag [#allocation3], %s460
          %s462 = sand.u32 %s121, 1
          %s463 = smul.addr %s462, 16
          %s464 = scalar_lea.vmem [#allocation2], %s463
          %466 = dma.done %s461, 256
        $region48: #{tpu_custom_call.1} parent=43 // pred_fallthru
          _
      $region44: #{tpu_custom_call.1} parent=5 // pred_fallthru
        _
    $region6: #{tpu_custom_call.1} parent=1 // loop_footer
      %s17 = sadd.s32 1, %s13
    $region7: #{tpu_custom_call.1} parent=1 // loop_footer_branch
      %12 = sbr.rel target = $region3
    $region8: #{tpu_custom_call.1} parent=1 // loop_exit
      _
    %467 = vsyncpa [#allocation3], 1
    %s468 = scalar_lea.sflag [#allocation3], 1
    %469 = vsyncpa %s468, 1

</llo_original>
